<compile_context>
chip_gen: v6e
topology: v6e:2x2x1
jax: 0.10.0
libtpu: 0.0.40
codegen_flags: <defaults>
</compile_context>

<pallas_src>
import jax
import jax.numpy as jnp
from jax.experimental import pallas as pl
from jax.experimental.pallas import tpu as pltpu


HIDDEN = 128          # fc1/fc2 width (fixed by the module)
OUT_PAD = 128         # lane-dense padded output width
TB_MAX = 1024         # max batch-tile rows per grid step


def _dqn_kernel(x_ref, w1_ref, b1_ref, w2_ref, b2_ref, w3_ref, b3_ref, o_ref):
    # One batch tile per grid step. All three matmuls feed the MXU with bf16
    # operands and f32 accumulation; bias add + ReLU run on the VPU in f32.
    x = x_ref[...]                                                  # bf16 (TB, S)

    h1 = jnp.dot(x, w1_ref[...], preferred_element_type=jnp.float32) + b1_ref[...]
    h1 = jnp.maximum(h1, 0.0)                                       # f32 (TB, 128)

    h2 = jnp.dot(h1.astype(jnp.bfloat16), w2_ref[...],
                 preferred_element_type=jnp.float32) + b2_ref[...]
    h2 = jnp.maximum(h2, 0.0)                                       # f32 (TB, 128)

    out = jnp.dot(h2.astype(jnp.bfloat16), w3_ref[...],
                  preferred_element_type=jnp.float32) + b3_ref[...]
    o_ref[...] = out.astype(o_ref.dtype)                            # f32 (TB, 128)


def _round_up(x, m):
    return ((x + m - 1) // m) * m


@jax.jit
def dqn_forward(x, params):
    """x: [B, state_dims] float32 -> [B, action_dims] float32."""
    w1, b1, w2, b2, w3, b3 = params
    batch, state_dims = x.shape
    action_dims = w3.shape[1]

    # ---- batch tiling (pad to a multiple of the tile so every block is full)
    b_pad = _round_up(max(batch, 8), 8)
    tb = min(TB_MAX, b_pad)
    b_pad = _round_up(b_pad, tb)
    num_blocks = b_pad // tb

    x_p = x
    if b_pad != batch:
        x_p = jnp.pad(x_p, ((0, b_pad - batch), (0, 0)))
    x_p = x_p.astype(jnp.bfloat16)

    # ---- lane-dense output: zero-pad fc3 to OUT_PAD columns (no-op if already 128)
    if action_dims != OUT_PAD:
        w3_p = jnp.pad(w3, ((0, 0), (0, OUT_PAD - action_dims)))
        b3_p = jnp.pad(b3, ((0, 0), (0, OUT_PAD - action_dims)))
    else:
        w3_p, b3_p = w3, b3

    # ---- bf16 MXU operands (biases stay f32)
    w1_b = w1.astype(jnp.bfloat16)
    w2_b = w2.astype(jnp.bfloat16)
    w3_b = w3_p.astype(jnp.bfloat16)
    b1_f = b1.astype(jnp.float32)
    b2_f = b2.astype(jnp.float32)
    b3_f = b3_p.astype(jnp.float32)

    const = lambda i: (0, 0)   # weights/biases resident in VMEM across the grid

    out_padded = pl.pallas_call(
        _dqn_kernel,
        out_shape=jax.ShapeDtypeStruct((b_pad, OUT_PAD), jnp.float32),
        grid_spec=pltpu.PrefetchScalarGridSpec(
            num_scalar_prefetch=0,
            grid=(num_blocks,),
            in_specs=[
                pl.BlockSpec((tb, state_dims), lambda i: (i, 0)),   # x tile
                pl.BlockSpec((state_dims, HIDDEN), const),          # w1
                pl.BlockSpec((1, HIDDEN), const),                   # b1
                pl.BlockSpec((HIDDEN, HIDDEN), const),              # w2
                pl.BlockSpec((1, HIDDEN), const),                   # b2
                pl.BlockSpec((HIDDEN, OUT_PAD), const),             # w3 (padded)
                pl.BlockSpec((1, OUT_PAD), const),                  # b3 (padded)
            ],
            out_specs=pl.BlockSpec((tb, OUT_PAD), lambda i: (i, 0)),
        ),
        compiler_params=pltpu.CompilerParams(
            dimension_semantics=("parallel",),        # shard batch across TCs (v7x)
            vmem_limit_bytes=32 * 1024 * 1024,        # safe on v5e/v6e/v7x
        ),
    )(x_p, w1_b, b1_f, w2_b, b2_f, w3_b, b3_f)

    return out_padded[:batch, :action_dims]


def init_params(key, state_dims, action_dims, hidden=HIDDEN):
    """Deterministic init mimicking nn.Linear's default U(-1/sqrt(fan_in), +)."""
    ks = jax.random.split(key, 6)

    def linear(kw, kb, fan_in, fan_out):
        bound = 1.0 / jnp.sqrt(jnp.float32(fan_in))
        # stored as [in, out] so the kernel does x @ W
        w = jax.random.uniform(kw, (fan_in, fan_out), jnp.float32, -bound, bound)
        b = jax.random.uniform(kb, (1, fan_out), jnp.float32, -bound, bound)
        return w, b

    w1, b1 = linear(ks[0], ks[1], state_dims, hidden)
    w2, b2 = linear(ks[2], ks[3], hidden, hidden)
    w3, b3 = linear(ks[4], ks[5], hidden, action_dims)
    return (w1, b1, w2, b2, w3, b3)


def reference_forward(x, params):
    """Plain-JAX f32 reference mirroring the PyTorch forward."""
    w1, b1, w2, b2, w3, b3 = params
    h1 = jnp.maximum(x @ w1 + b1, 0.0)
    h2 = jnp.maximum(h1 @ w2 + b2, 0.0)
    return h2 @ w3 + b3


if __name__ == "__main__":
    key = jax.random.PRNGKey(0)
    k_params, k_state = jax.random.split(key)

    state_dims = 32
    action_dims = 8
    batch = 8

    params = init_params(k_params, state_dims, action_dims)
    state_batch = jax.random.normal(k_state, (batch, state_dims), jnp.float32)

    out = dqn_forward(state_batch, params)
    out = jax.block_until_ready(out)

    ref = reference_forward(state_batch, params)
    assert out.shape == (batch, action_dims)
    # bf16 MXU operands with f32 accumulation -> loose tolerance vs f32 reference.
    assert jnp.allclose(out, ref, atol=5e-2, rtol=5e-2), (
        float(jnp.max(jnp.abs(out - ref))))

    print("KERNEL_OK")
</pallas_src>

<mosaic_0001>
module attributes {stable_mosaic.version = 11 : i64} {
  func.func @_dqn_kernel(%arg0: i32, %arg1: memref<8x32xbf16, #tpu.memory_space<vmem>>, %arg2: memref<32x128xbf16, #tpu.memory_space<vmem>>, %arg3: memref<1x128xf32, #tpu.memory_space<vmem>>, %arg4: memref<128x128xbf16, #tpu.memory_space<vmem>>, %arg5: memref<1x128xf32, #tpu.memory_space<vmem>>, %arg6: memref<128x128xbf16, #tpu.memory_space<vmem>>, %arg7: memref<1x128xf32, #tpu.memory_space<vmem>>, %arg8: memref<8x128xf32, #tpu.memory_space<vmem>>) attributes {dimension_semantics = [#tpu.dimension_semantics<parallel>], iteration_bounds = array<i64: 1>, scalar_prefetch = 0 : i64, scratch_operands = 0 : i64, tpu.core_type = #tpu.core_type<tc>, window_params = [{transform_indices = @transform_0, window_bounds = array<i64: 8, 32>}, {pipeline_mode = #tpu.pipeline_mode<synchronous>, transform_indices = @transform_1, window_bounds = array<i64: 32, 128>}, {pipeline_mode = #tpu.pipeline_mode<synchronous>, transform_indices = @transform_2, window_bounds = array<i64: 1, 128>}, {pipeline_mode = #tpu.pipeline_mode<synchronous>, transform_indices = @transform_3, window_bounds = array<i64: 128, 128>}, {pipeline_mode = #tpu.pipeline_mode<synchronous>, transform_indices = @transform_4, window_bounds = array<i64: 1, 128>}, {pipeline_mode = #tpu.pipeline_mode<synchronous>, transform_indices = @transform_5, window_bounds = array<i64: 128, 128>}, {pipeline_mode = #tpu.pipeline_mode<synchronous>, transform_indices = @transform_6, window_bounds = array<i64: 1, 128>}, {transform_indices = @transform_7, window_bounds = array<i64: 8, 128>}]} {
    %c0 = arith.constant 0 : index
    %c0_0 = arith.constant 0 : index
    %0 = vector.load %arg1[%c0, %c0_0] : memref<8x32xbf16, #tpu.memory_space<vmem>>, vector<8x32xbf16>
    %c0_1 = arith.constant 0 : index
    %c0_2 = arith.constant 0 : index
    %1 = vector.load %arg2[%c0_1, %c0_2] : memref<32x128xbf16, #tpu.memory_space<vmem>>, vector<32x128xbf16>
    %cst = arith.constant dense<0.000000e+00> : vector<8x128xf32>
    %2 = tpu.matmul %0, %1, %cst {dimension_numbers = #tpu.dot_dimension_numbers<[1], [0], [0], [1], [0, 0, 1, 1], [], []>} : vector<8x32xbf16>, vector<32x128xbf16>, vector<8x128xf32> -> vector<8x128xf32>
    %c0_3 = arith.constant 0 : index
    %c0_4 = arith.constant 0 : index
    %3 = vector.load %arg3[%c0_3, %c0_4] : memref<1x128xf32, #tpu.memory_space<vmem>>, vector<1x128xf32>
    %4 = vector.broadcast %3 : vector<1x128xf32> to vector<8x128xf32>
    %5 = arith.addf %2, %4 : vector<8x128xf32>
    %cst_5 = arith.constant 0.000000e+00 : f32
    %6 = vector.broadcast %cst_5 : f32 to vector<8x128xf32>
    %7 = arith.maximumf %5, %6 : vector<8x128xf32>
    %8 = arith.truncf %7 : vector<8x128xf32> to vector<8x128xbf16>
    %c0_6 = arith.constant 0 : index
    %c0_7 = arith.constant 0 : index
    %9 = vector.load %arg4[%c0_6, %c0_7] : memref<128x128xbf16, #tpu.memory_space<vmem>>, vector<128x128xbf16>
    %cst_8 = arith.constant dense<0.000000e+00> : vector<8x128xf32>
    %10 = tpu.matmul %8, %9, %cst_8 {dimension_numbers = #tpu.dot_dimension_numbers<[1], [0], [0], [1], [0, 0, 1, 1], [], []>} : vector<8x128xbf16>, vector<128x128xbf16>, vector<8x128xf32> -> vector<8x128xf32>
    %c0_9 = arith.constant 0 : index
    %c0_10 = arith.constant 0 : index
    %11 = vector.load %arg5[%c0_9, %c0_10] : memref<1x128xf32, #tpu.memory_space<vmem>>, vector<1x128xf32>
    %12 = vector.broadcast %11 : vector<1x128xf32> to vector<8x128xf32>
    %13 = arith.addf %10, %12 : vector<8x128xf32>
    %cst_11 = arith.constant 0.000000e+00 : f32
    %14 = vector.broadcast %cst_11 : f32 to vector<8x128xf32>
    %15 = arith.maximumf %13, %14 : vector<8x128xf32>
    %16 = arith.truncf %15 : vector<8x128xf32> to vector<8x128xbf16>
    %c0_12 = arith.constant 0 : index
    %c0_13 = arith.constant 0 : index
    %17 = vector.load %arg6[%c0_12, %c0_13] : memref<128x128xbf16, #tpu.memory_space<vmem>>, vector<128x128xbf16>
    %cst_14 = arith.constant dense<0.000000e+00> : vector<8x128xf32>
    %18 = tpu.matmul %16, %17, %cst_14 {dimension_numbers = #tpu.dot_dimension_numbers<[1], [0], [0], [1], [0, 0, 1, 1], [], []>} : vector<8x128xbf16>, vector<128x128xbf16>, vector<8x128xf32> -> vector<8x128xf32>
    %c0_15 = arith.constant 0 : index
    %c0_16 = arith.constant 0 : index
    %19 = vector.load %arg7[%c0_15, %c0_16] : memref<1x128xf32, #tpu.memory_space<vmem>>, vector<1x128xf32>
    %20 = vector.broadcast %19 : vector<1x128xf32> to vector<8x128xf32>
    %21 = arith.addf %18, %20 : vector<8x128xf32>
    %c0_17 = arith.constant 0 : index
    %c0_18 = arith.constant 0 : index
    %22 = vector.load %arg8[%c0_17, %c0_18] : memref<8x128xf32, #tpu.memory_space<vmem>>, vector<8x128xf32>
    tpu.vector_store %arg8[%c0_17, %c0_18], %21 {strides = array<i32>} : memref<8x128xf32, #tpu.memory_space<vmem>>, vector<8x128xf32>,
    return
  }
  func.func @transform_0(%arg0: i32) -> (i32, i32) {
    %c0_i32 = arith.constant 0 : i32
    %c0_i32_0 = arith.constant 0 : i32
    return %arg0, %c0_i32 : i32, i32
  }
  func.func @transform_1(%arg0: i32) -> (i32, i32) {
    %c0_i32 = arith.constant 0 : i32
    %c0_i32_0 = arith.constant 0 : i32
    %c0_i32_1 = arith.constant 0 : i32
    return %c0_i32, %c0_i32_0 : i32, i32
  }
  func.func @transform_2(%arg0: i32) -> (i32, i32) {
    %c0_i32 = arith.constant 0 : i32
    %c0_i32_0 = arith.constant 0 : i32
    %c0_i32_1 = arith.constant 0 : i32
    return %c0_i32, %c0_i32_0 : i32, i32
  }
  func.func @transform_3(%arg0: i32) -> (i32, i32) {
    %c0_i32 = arith.constant 0 : i32
    %c0_i32_0 = arith.constant 0 : i32
    %c0_i32_1 = arith.constant 0 : i32
    return %c0_i32, %c0_i32_0 : i32, i32
  }
  func.func @transform_4(%arg0: i32) -> (i32, i32) {
    %c0_i32 = arith.constant 0 : i32
    %c0_i32_0 = arith.constant 0 : i32
    %c0_i32_1 = arith.constant 0 : i32
    return %c0_i32, %c0_i32_0 : i32, i32
  }
  func.func @transform_5(%arg0: i32) -> (i32, i32) {
    %c0_i32 = arith.constant 0 : i32
    %c0_i32_0 = arith.constant 0 : i32
    %c0_i32_1 = arith.constant 0 : i32
    return %c0_i32, %c0_i32_0 : i32, i32
  }
  func.func @transform_6(%arg0: i32) -> (i32, i32) {
    %c0_i32 = arith.constant 0 : i32
    %c0_i32_0 = arith.constant 0 : i32
    %c0_i32_1 = arith.constant 0 : i32
    return %c0_i32, %c0_i32_0 : i32, i32
  }
  func.func @transform_7(%arg0: i32) -> (i32, i32) {
    %c0_i32 = arith.constant 0 : i32
    %c0_i32_0 = arith.constant 0 : i32
    return %arg0, %c0_i32 : i32, i32
  }
}

</mosaic_0001>

<llo_original>
// kernel: dqn_forward.1
$region0: #{dqn_forward.1}
  #allocation0 [shape = 'u32[]', space=smem, size = 0x4, offset = 0x4, fixed_abs, tag = 'smem constant byte address 0x4 - core index']
  #allocation1 [shape = 'u32[144,128]{1,0:T(1,128)}', space=vmem, size = 0x12000, scoped, tag = 'internal scratch']
  %s0 = inlined_call_operand.vmem [shape: bf16[8,32], index: 0, kind: input, shape index: {}]
  %s1 = inlined_call_operand.vmem [shape: bf16[32,128], index: 1, kind: input, shape index: {}]
  %s2 = inlined_call_operand.vmem [shape: f32[1,128], index: 2, kind: input, shape index: {}]
  %s3 = inlined_call_operand.vmem [shape: bf16[128,128], index: 3, kind: input, shape index: {}]
  %s4 = inlined_call_operand.vmem [shape: f32[1,128], index: 4, kind: input, shape index: {}]
  %s5 = inlined_call_operand.vmem [shape: bf16[128,128], index: 5, kind: input, shape index: {}]
  %s6 = inlined_call_operand.vmem [shape: f32[1,128], index: 6, kind: input, shape index: {}]
  %s7 = inlined_call_operand.hbm [shape: f32[8,128], index: 7, kind: output, shape index: {}]
  %s8 = sld [smem:[#allocation0]]
  $region38: #{dqn_forward.1} parent=0
    _
  %s10 = ssub.s32 1, %s8
  %s11 = scalar_select 0, %s10, %s8
  $region1: #{dqn_forward.1} parent=0
    #allocation2 [shape = 'u8[4096]{0}', space=vmem, size = 0x1000, scoped, tag = 'output window, operand 0, single buffered']
    #allocation3 [shape = 's32[1]{0}', space=sflag, size = 0x4, scoped, tag = 'scoped memory for dqn_forward.1']
    %12 = vsyncpa [#allocation3], 0
    // Predicated region
    $region2: #{dqn_forward.1} parent=1 // pred_check
      _
    $region3: #{dqn_forward.1} parent=1 // pred_check_branch
      %14 = sbr.rel (0) target = $region5
    $region4: #{dqn_forward.1} parent=1 // pred_region
      _
    $region5: #{dqn_forward.1} parent=1 // pred_fallthru
      _
    // Predicated region
    $region6: #{dqn_forward.1} parent=1 // pred_check
      _
    $region7: #{dqn_forward.1} parent=1 // pred_check_branch
      %16 = sbr.rel (0) target = $region9
    $region8: #{dqn_forward.1} parent=1 // pred_region
      _
    $region9: #{dqn_forward.1} parent=1 // pred_fallthru
      _
    // Predicated region
    $region10: #{dqn_forward.1} parent=1 // pred_check
      _
    $region11: #{dqn_forward.1} parent=1 // pred_check_branch
      %18 = sbr.rel (0) target = $region13
    $region12: #{dqn_forward.1} parent=1 // pred_region
      _
    $region13: #{dqn_forward.1} parent=1 // pred_fallthru
      _
    // Predicated region
    $region14: #{dqn_forward.1} parent=1 // pred_check
      _
    $region15: #{dqn_forward.1} parent=1 // pred_check_branch
      %20 = sbr.rel (0) target = $region17
    $region16: #{dqn_forward.1} parent=1 // pred_region
      _
    $region17: #{dqn_forward.1} parent=1 // pred_fallthru
      _
    // Predicated region
    $region18: #{dqn_forward.1} parent=1 // pred_check
      _
    $region19: #{dqn_forward.1} parent=1 // pred_check_branch
      %22 = sbr.rel (0) target = $region21
    $region20: #{dqn_forward.1} parent=1 // pred_region
      _
    $region21: #{dqn_forward.1} parent=1 // pred_fallthru
      _
    // Predicated region
    $region22: #{dqn_forward.1} parent=1 // pred_check
      _
    $region23: #{dqn_forward.1} parent=1 // pred_check_branch
      %24 = sbr.rel (0) target = $region25
    $region24: #{dqn_forward.1} parent=1 // pred_region
      _
    $region25: #{dqn_forward.1} parent=1 // pred_fallthru
      _
    // Predicated region
    $region26: #{dqn_forward.1} parent=1 // pred_check
      _
    $region27: #{dqn_forward.1} parent=1 // pred_check_branch
      %26 = sbr.rel (0) target = $region29
    $region28: #{dqn_forward.1} parent=1 // pred_region
      _
    $region29: #{dqn_forward.1} parent=1 // pred_fallthru
      _
    %v28 = vld [vmem:[%s0] sm:$0xf]
    %v29 = vld [vmem:[%s1] sm:$0xf]
    %v30 = vld [vmem:[%s1 + $0x4] sm:$0xf]
    %v31 = vld [vmem:[%s1 + $0x8] sm:$0xf]
    %v32 = vld [vmem:[%s1 + $0xc] sm:$0xf]
    %v33 = vld [vmem:[%s2] sm:$0x1]
    %v35 = vlaneseq
    %v36 = vshrl.u32 %v35, 7
    %v37 = vsub.s32 0, %v36
    %v38 = vrot.slane %v33, %v37
    %v44 = vunpack.c.l.b16 %v29
    %v45 = vunpack.c.l.b16 %v30
    %v46 = vunpack.c.l.b16 %v31
    %v47 = vunpack.c.l.b16 %v32
    %v48 = vpack.c.b16 %v45, %v44
    %v49 = vpack.c.b16 %v47, %v46
    %vm52 = vcmask 261120
    %v54 = vsel %vm52, %v28, 0
    %56 = vmatprep.subr.bf16.mxu0 0
    %57 = vmatpush1.bf16.msra.mxu0 0
    %58 = vmatprep.subr.bf16.mxu0 0
    %59 = vmatpush1.bf16.msra.mxu0 0
    %60 = vmatprep.subr.bf16.mxu0 0
    %61 = vmatpush1.bf16.msra.mxu0 0
    %62 = vmatprep.subr.bf16.mxu0 0
    %63 = vmatpush1.bf16.msra.mxu0 0
    %64 = vmatprep.subr.bf16.mxu0 0
    %65 = vmatpush1.bf16.msra.mxu0 0
    %66 = vmatprep.subr.bf16.mxu0 0
    %67 = vmatpush1.bf16.msra.mxu0 0
    %68 = vmatprep.subr.bf16.mxu0 0
    %69 = vmatpush1.bf16.msra.mxu0 %v49
    %70 = vmatprep.subr.bf16.mxu0 0
    %71 = vmatpush1.bf16.msra.mxu0 %v48
    %72 = vmatprep.subr.bf16.mxu0 0
    %73 = vmatpush2.bf16.msra.mxu0 0
    %74 = vmatprep.subr.bf16.mxu0 0
    %75 = vmatpush2.bf16.msra.mxu0 0
    %76 = vmatprep.subr.bf16.mxu0 0
    %77 = vmatpush2.bf16.msra.mxu0 0
    %78 = vmatprep.subr.bf16.mxu0 0
    %79 = vmatpush2.bf16.msra.mxu0 0
    %80 = vmatprep.subr.bf16.mxu0 0
    %81 = vmatpush2.bf16.msra.mxu0 0
    %82 = vmatprep.subr.bf16.mxu0 0
    %83 = vmatpush2.bf16.msra.mxu0 0
    %84 = vmatprep.subr.bf16.mxu0 0
    %85 = vmatpush2.bf16.msra.mxu0 0
    %86 = vmatprep.subr.bf16.mxu0 0
    %87 = vmatpush2.bf16.msra.mxu0 0
    %88 = vmatprep.mubr.bf16.mxu0 0
    %89 = vmatmul.mubr.bf16.gmra.mxu0 %v54
    %v90 = vpop.f32.mrf.mxu0
    %v91 = vadd.f32 %v38, %v90
    %v92 = vpop.f32.mrf.mxu0
    %v93 = vpop.f32.mrf.mxu0
    %v94 = vpop.f32.mrf.mxu0
    %95 = vdwg.mxu0
    %v96 = vmax.f32 %v91, 0.0
    %v97 = vpack.c.bf16 %v96, %v96
    %v98 = vld [vmem:[%s3] sm:$0xf]
    %v99 = vld [vmem:[%s3 + $0x4] sm:$0xf]
    %v100 = vld [vmem:[%s3 + $0x8] sm:$0xf]
    %v101 = vld [vmem:[%s3 + $0xc] sm:$0xf]
    %v102 = vld [vmem:[%s3 + $0x10] sm:$0xf]
    %v103 = vld [vmem:[%s3 + $0x14] sm:$0xf]
    %v104 = vld [vmem:[%s3 + $0x18] sm:$0xf]
    %v105 = vld [vmem:[%s3 + $0x1c] sm:$0xf]
    %v106 = vld [vmem:[%s3 + $0x20] sm:$0xf]
    %v107 = vld [vmem:[%s3 + $0x24] sm:$0xf]
    %v108 = vld [vmem:[%s3 + $0x28] sm:$0xf]
    %v109 = vld [vmem:[%s3 + $0x2c] sm:$0xf]
    %v110 = vld [vmem:[%s3 + $0x30] sm:$0xf]
    %v111 = vld [vmem:[%s3 + $0x34] sm:$0xf]
    %v112 = vld [vmem:[%s3 + $0x38] sm:$0xf]
    %v113 = vld [vmem:[%s3 + $0x3c] sm:$0xf]
    %v114 = vld [vmem:[%s4] sm:$0x1]
    %v116 = vlaneseq
    %v117 = vshrl.u32 %v116, 7
    %v118 = vsub.s32 0, %v117
    %v119 = vrot.slane %v114, %v118
    %v137 = vunpack.c.l.b16 %v98
    %v138 = vunpack.c.l.b16 %v99
    %v139 = vunpack.c.l.b16 %v100
    %v140 = vunpack.c.l.b16 %v101
    %v141 = vunpack.c.l.b16 %v102
    %v142 = vunpack.c.l.b16 %v103
    %v143 = vunpack.c.l.b16 %v104
    %v144 = vunpack.c.l.b16 %v105
    %v145 = vunpack.c.l.b16 %v106
    %v146 = vunpack.c.l.b16 %v107
    %v147 = vunpack.c.l.b16 %v108
    %v148 = vunpack.c.l.b16 %v109
    %v149 = vunpack.c.l.b16 %v110
    %v150 = vunpack.c.l.b16 %v111
    %v151 = vunpack.c.l.b16 %v112
    %v152 = vunpack.c.l.b16 %v113
    %v153 = vpack.c.b16 %v138, %v137
    %v154 = vpack.c.b16 %v140, %v139
    %v155 = vpack.c.b16 %v142, %v141
    %v156 = vpack.c.b16 %v144, %v143
    %v157 = vpack.c.b16 %v146, %v145
    %v158 = vpack.c.b16 %v148, %v147
    %v159 = vpack.c.b16 %v150, %v149
    %v160 = vpack.c.b16 %v152, %v151
    %169 = vmatprep.subr.bf16.mxu0 0
    %170 = vmatpush1.bf16.msra.mxu0 %v160
    %171 = vmatprep.subr.bf16.mxu0 0
    %172 = vmatpush1.bf16.msra.mxu0 %v159
    %173 = vmatprep.subr.bf16.mxu0 0
    %174 = vmatpush1.bf16.msra.mxu0 %v158
    %175 = vmatprep.subr.bf16.mxu0 0
    %176 = vmatpush1.bf16.msra.mxu0 %v157
    %177 = vmatprep.subr.bf16.mxu0 0
    %178 = vmatpush1.bf16.msra.mxu0 %v156
    %179 = vmatprep.subr.bf16.mxu0 0
    %180 = vmatpush1.bf16.msra.mxu0 %v155
    %181 = vmatprep.subr.bf16.mxu0 0
    %182 = vmatpush1.bf16.msra.mxu0 %v154
    %183 = vmatprep.subr.bf16.mxu0 0
    %184 = vmatpush1.bf16.msra.mxu0 %v153
    %185 = vmatprep.subr.bf16.mxu0 0
    %186 = vmatpush2.bf16.msra.mxu0 0
    %187 = vmatprep.subr.bf16.mxu0 0
    %188 = vmatpush2.bf16.msra.mxu0 0
    %189 = vmatprep.subr.bf16.mxu0 0
    %190 = vmatpush2.bf16.msra.mxu0 0
    %191 = vmatprep.subr.bf16.mxu0 0
    %192 = vmatpush2.bf16.msra.mxu0 0
    %193 = vmatprep.subr.bf16.mxu0 0
    %194 = vmatpush2.bf16.msra.mxu0 0
    %195 = vmatprep.subr.bf16.mxu0 0
    %196 = vmatpush2.bf16.msra.mxu0 0
    %197 = vmatprep.subr.bf16.mxu0 0
    %198 = vmatpush2.bf16.msra.mxu0 0
    %199 = vmatprep.subr.bf16.mxu0 0
    %200 = vmatpush2.bf16.msra.mxu0 0
    %201 = vmatprep.mubr.bf16.mxu0 0
    %202 = vmatmul.mubr.bf16.gmra.mxu0 %v97
    %v203 = vpop.f32.mrf.mxu0
    %v204 = vadd.f32 %v119, %v203
    %v205 = vpop.f32.mrf.mxu0
    %v206 = vpop.f32.mrf.mxu0
    %v207 = vpop.f32.mrf.mxu0
    %208 = vdwg.mxu0
    %v209 = vmax.f32 %v204, 0.0
    %v210 = vpack.c.bf16 %v209, %v209
    %v211 = vld [vmem:[%s5] sm:$0xf]
    %v212 = vld [vmem:[%s5 + $0x4] sm:$0xf]
    %v213 = vld [vmem:[%s5 + $0x8] sm:$0xf]
    %v214 = vld [vmem:[%s5 + $0xc] sm:$0xf]
    %v215 = vld [vmem:[%s5 + $0x10] sm:$0xf]
    %v216 = vld [vmem:[%s5 + $0x14] sm:$0xf]
    %v217 = vld [vmem:[%s5 + $0x18] sm:$0xf]
    %v218 = vld [vmem:[%s5 + $0x1c] sm:$0xf]
    %v219 = vld [vmem:[%s5 + $0x20] sm:$0xf]
    %v220 = vld [vmem:[%s5 + $0x24] sm:$0xf]
    %v221 = vld [vmem:[%s5 + $0x28] sm:$0xf]
    %v222 = vld [vmem:[%s5 + $0x2c] sm:$0xf]
    %v223 = vld [vmem:[%s5 + $0x30] sm:$0xf]
    %v224 = vld [vmem:[%s5 + $0x34] sm:$0xf]
    %v225 = vld [vmem:[%s5 + $0x38] sm:$0xf]
    %v226 = vld [vmem:[%s5 + $0x3c] sm:$0xf]
    %v227 = vld [vmem:[%s6] sm:$0x1]
    %v229 = vlaneseq
    %v230 = vshrl.u32 %v229, 7
    %v231 = vsub.s32 0, %v230
    %v232 = vrot.slane %v227, %v231
    %v250 = vunpack.c.l.b16 %v211
    %v251 = vunpack.c.l.b16 %v212
    %v252 = vunpack.c.l.b16 %v213
    %v253 = vunpack.c.l.b16 %v214
    %v254 = vunpack.c.l.b16 %v215
    %v255 = vunpack.c.l.b16 %v216
    %v256 = vunpack.c.l.b16 %v217
    %v257 = vunpack.c.l.b16 %v218
    %v258 = vunpack.c.l.b16 %v219
    %v259 = vunpack.c.l.b16 %v220
    %v260 = vunpack.c.l.b16 %v221
    %v261 = vunpack.c.l.b16 %v222
    %v262 = vunpack.c.l.b16 %v223
    %v263 = vunpack.c.l.b16 %v224
    %v264 = vunpack.c.l.b16 %v225
    %v265 = vunpack.c.l.b16 %v226
    %v266 = vpack.c.b16 %v251, %v250
    %v267 = vpack.c.b16 %v253, %v252
    %v268 = vpack.c.b16 %v255, %v254
    %v269 = vpack.c.b16 %v257, %v256
    %v270 = vpack.c.b16 %v259, %v258
    %v271 = vpack.c.b16 %v261, %v260
    %v272 = vpack.c.b16 %v263, %v262
    %v273 = vpack.c.b16 %v265, %v264
    %282 = vmatprep.subr.bf16.mxu0 0
    %283 = vmatpush1.bf16.msra.mxu0 %v273
    %284 = vmatprep.subr.bf16.mxu0 0
    %285 = vmatpush1.bf16.msra.mxu0 %v272
    %286 = vmatprep.subr.bf16.mxu0 0
    %287 = vmatpush1.bf16.msra.mxu0 %v271
    %288 = vmatprep.subr.bf16.mxu0 0
    %289 = vmatpush1.bf16.msra.mxu0 %v270
    %290 = vmatprep.subr.bf16.mxu0 0
    %291 = vmatpush1.bf16.msra.mxu0 %v269
    %292 = vmatprep.subr.bf16.mxu0 0
    %293 = vmatpush1.bf16.msra.mxu0 %v268
    %294 = vmatprep.subr.bf16.mxu0 0
    %295 = vmatpush1.bf16.msra.mxu0 %v267
    %296 = vmatprep.subr.bf16.mxu0 0
    %297 = vmatpush1.bf16.msra.mxu0 %v266
    %298 = vmatprep.subr.bf16.mxu0 0
    %299 = vmatpush2.bf16.msra.mxu0 0
    %300 = vmatprep.subr.bf16.mxu0 0
    %301 = vmatpush2.bf16.msra.mxu0 0
    %302 = vmatprep.subr.bf16.mxu0 0
    %303 = vmatpush2.bf16.msra.mxu0 0
    %304 = vmatprep.subr.bf16.mxu0 0
    %305 = vmatpush2.bf16.msra.mxu0 0
    %306 = vmatprep.subr.bf16.mxu0 0
    %307 = vmatpush2.bf16.msra.mxu0 0
    %308 = vmatprep.subr.bf16.mxu0 0
    %309 = vmatpush2.bf16.msra.mxu0 0
    %310 = vmatprep.subr.bf16.mxu0 0
    %311 = vmatpush2.bf16.msra.mxu0 0
    %312 = vmatprep.subr.bf16.mxu0 0
    %313 = vmatpush2.bf16.msra.mxu0 0
    %314 = vmatprep.mubr.bf16.mxu0 0
    %315 = vmatmul.mubr.bf16.gmra.mxu0 %v210
    %v316 = vpop.f32.mrf.mxu0
    %v317 = vadd.f32 %v232, %v316
    %v318 = vpop.f32.mrf.mxu0
    %v319 = vpop.f32.mrf.mxu0
    %v320 = vpop.f32.mrf.mxu0
    %321 = vdwg.mxu0
    %322 = vst [vmem:[#allocation2] sm:$0xff] %v317
    // Predicated region
    $region30: #{dqn_forward.1} parent=1 // pred_check
      _
    $region31: #{dqn_forward.1} parent=1 // pred_check_branch
      %324 = sbr.rel (0) target = $region33
    $region32: #{dqn_forward.1} parent=1 // pred_region
      %s326 = ssub.s32 128, 128
      %327 = vsyncadd [#allocation3], %s326
      %s329 = sshll.u32 [#allocation2], 4
      %s330 = int_to_ptr.vmem [resolvable:$true] %s329
      %332 = dma.vmem_to_hbm [thread:$0]  %s330, 128, %s7, [#allocation3]
    $region33: #{dqn_forward.1} parent=1 // pred_fallthru
      _
    // Predicated region
    $region34: #{dqn_forward.1} parent=1 // pred_check
      _
    $region35: #{dqn_forward.1} parent=1 // pred_check_branch
      %334 = sbr.rel (0) target = $region37
    $region36: #{dqn_forward.1} parent=1 // pred_region
      %335 = dma.done [#allocation3], 128
    $region37: #{dqn_forward.1} parent=1 // pred_fallthru
      _
    %336 = vsyncpa [#allocation3], 1

</llo_original>
